<compile_context>
chip_gen: v7x
topology: tpu7x:2x2x1
jax: 0.10.0
libtpu: 0.0.40
codegen_flags: <defaults>
</compile_context>

<pallas_src>
import functools

import jax
import jax.numpy as jnp
from jax.experimental import pallas as pl
from jax.experimental.pallas import tpu as pltpu


def _round_up(x, m):
    return ((x + m - 1) // m) * m


def _relu_pow(sub, p):
    """sub ** p for sub >= 0; repeated multiply for small integer p (VALU only)."""
    if p == 1.0:
        return sub
    if float(p).is_integer() and 2.0 <= p <= 8.0:
        out = sub
        for _ in range(int(p) - 1):
            out = out * sub
        return out
    # Generic (non-integer) p: one transcendental per element through the
    # single EUP slot -- correct but much slower than the p in {1, 2} paths.
    return jnp.where(sub > 0.0, jnp.power(sub, p), 0.0)


def _order_kernel(row_ref, lane_ref, out_ref, acc_ref, *, p, reverse, n_rows):
    # row_ref : (1, td, tr)  row operand tile: features on sublanes, rows on lanes
    # lane_ref: (td, tc)     lane operand tile: features on sublanes, cols on lanes
    # out_ref : (tr, tc)     lane-dense output tile
    # acc_ref : (tr, tc) f32 scratch; persists across the D-chunk grid axis (k)
    k = pl.program_id(2)

    @pl.when(k == 0)
    def _init():
        acc_ref[...] = jnp.zeros_like(acc_ref)

    row_c = row_ref[0]        # (td, tr)
    lane_c = lane_ref[...]    # (td, tc)

    # Static (fully unrolled) loop over the rows of this output tile.  Each row
    # touches one (td, tc) slab (16 vregs/stage for 128x128 f32) and is reduced
    # over the sublane axis with plain vreg adds -- no cross-lane reduce, no
    # relayout; the partial row is already lane-dense.
    for r in range(n_rows):
        col = row_c[:, r:r + 1]                                    # (td, 1)
        diff = (col - lane_c) if reverse else (lane_c - col)       # (td, tc)
        sub = jnp.maximum(diff, 0.0)
        contrib = jnp.sum(_relu_pow(sub, p).astype(jnp.float32),
                          axis=0, keepdims=True)                   # (1, tc)
        acc_ref[r:r + 1, :] += contrib

    @pl.when(k == pl.num_programs(2) - 1)
    def _finalize():
        acc = acc_ref[...]
        if p == 1.0:
            dist = acc
        elif p == 2.0:
            dist = jnp.sqrt(acc)
        else:
            dist = jnp.where(acc > 0.0, jnp.power(acc, 1.0 / p), 0.0)
        out_ref[...] = (-dist).astype(out_ref.dtype)


def _order_core(row_op, lane_op, *, p, reverse, tr, tc, td, compute_dtype):
    """out[r, c] = -|| relu(lane_op[c] - row_op[r]) ||_p   (reverse=False)
       out[r, c] = -|| relu(row_op[r] - lane_op[c]) ||_p   (reverse=True)

    row_op: (R, D), lane_op: (C, D) -> out: (R, C) float32.
    """
    R, D = row_op.shape
    C, Dc = lane_op.shape
    assert D == Dc, "feature dims must match"

    # ---- tile sizes / padding ------------------------------------------------
    td_eff = min(td, _round_up(D, 8))              # D chunk (sublane axis)
    D_pad = _round_up(D, td_eff)
    nd = D_pad // td_eff

    tc_eff = max(128, (min(tc, 256) // 128) * 128)  # keep output lane-dense
    C_pad = _round_up(C, tc_eff)

    tr_eff = min(tr, _round_up(R, 8))
    R_pad = _round_up(R, tr_eff)
    # v7x has 2 TensorCores: give the parallel part of the grid >= 2 cells
    # whenever the row axis is splittable.
    if (R_pad // tr_eff) * (C_pad // tc_eff) < 2 and R_pad >= 16:
        tr_eff = max(8, _round_up(tr_eff // 2, 8))
        R_pad = _round_up(R, tr_eff)
    nb = R_pad // tr_eff

    # ---- operand layout (one pass each; nothing of size R*C*D is built) -----
    # Zero padding is exact: padded feature columns contribute relu(0 - 0) = 0,
    # padded rows/cols are sliced away below.
    cdt = compute_dtype
    row_p = jnp.pad(row_op.astype(cdt), ((0, R_pad - R), (0, D_pad - D)))
    lane_p = jnp.pad(lane_op.astype(cdt), ((0, C_pad - C), (0, D_pad - D)))

    # Row operand as (nb, D_pad, tr): each row's feature vector is a (td, 1)
    # lane column of its tile (no in-kernel transposes or dynamic lane ops).
    row_3d = row_p.reshape(nb, tr_eff, D_pad).transpose(0, 2, 1)
    # Lane operand as (D_pad, C_pad): its index sits on lanes, matching the
    # output layout.
    lane_t = lane_p.T

    kernel = functools.partial(_order_kernel, p=p, reverse=reverse,
                               n_rows=tr_eff)

    out_pad = pl.pallas_call(
        kernel,
        out_shape=jax.ShapeDtypeStruct((R_pad, C_pad), jnp.float32),
        grid_spec=pltpu.PrefetchScalarGridSpec(
            num_scalar_prefetch=0,
            grid=(nb, C_pad // tc_eff, nd),            # reduction (D) axis last
            in_specs=[
                pl.BlockSpec((1, td_eff, tr_eff), lambda i, j, k: (i, k, 0)),
                pl.BlockSpec((td_eff, tc_eff), lambda i, j, k: (k, j)),
            ],
            out_specs=pl.BlockSpec((tr_eff, tc_eff), lambda i, j, k: (i, j)),
            scratch_shapes=[pltpu.VMEM((tr_eff, tc_eff), jnp.float32)],
        ),
        compiler_params=pltpu.CompilerParams(
            dimension_semantics=("parallel", "parallel", "arbitrary"),
        ),
    )(row_3d, lane_t)

    return out_pad[:R, :C]


def order_similarity(lab_vecs, vis_vecs, *, norm=2.0, block_rows=128,
                     block_cols=128, block_d=128, compute_dtype=jnp.float32):
    """Pallas equivalent of _OrderSimilarity(norm).forward(lab_vecs, vis_vecs).

    Pass compute_dtype=jnp.bfloat16 on v6e/v7x for ~2x elementwise throughput
    (accumulation stays in f32); keep float32 on v5e.
    """
    L, D = lab_vecs.shape
    V, Dv = vis_vecs.shape
    assert D == Dv, "feature dims must match"

    p = float(norm)
    if L < 128 and V > L:
        # Few labels, many visuals: put V on the lane axis (lane-dense stores),
        # compute the transposed result and transpose once outside the kernel.
        out_t = _order_core(lab_vecs, vis_vecs, p=p, reverse=True,
                            tr=block_rows, tc=block_cols, td=block_d,
                            compute_dtype=compute_dtype)         # (L, V)
        return out_t.T
    return _order_core(vis_vecs, lab_vecs, p=p, reverse=False,
                       tr=block_rows, tc=block_cols, td=block_d,
                       compute_dtype=compute_dtype)              # (V, L)


def _reference(lab_vecs, vis_vecs, norm=2.0):
    sub = jnp.maximum(lab_vecs[None, :, :] - vis_vecs[:, None, :], 0.0)
    if norm == 1.0:
        dist = jnp.sum(sub, axis=-1)
    elif norm == 2.0:
        dist = jnp.sqrt(jnp.sum(sub * sub, axis=-1))
    else:
        dist = jnp.power(jnp.sum(jnp.power(sub, norm), axis=-1), 1.0 / norm)
    return -dist


if __name__ == "__main__":
    key = jax.random.PRNGKey(0)
    k1, k2, k3, k4, k5, k6 = jax.random.split(key, 6)

    # 1) Small square case (module-typical tiny shapes), p = 2.
    L, V, D = 16, 16, 32
    lab = jax.random.normal(k1, (L, D), dtype=jnp.float32)
    vis = jax.random.normal(k2, (V, D), dtype=jnp.float32)
    out = jax.block_until_ready(order_similarity(lab, vis, norm=2.0))
    ref = _reference(lab, vis, norm=2.0)
    assert out.shape == (V, L)
    assert jnp.allclose(out, ref, atol=1e-4, rtol=1e-5)

    # 2) Ragged "few labels, more visuals" case (transposed-output path), p=1.
    L2, V2, D2 = 10, 13, 20
    lab2 = jax.random.normal(k3, (L2, D2), dtype=jnp.float32)
    vis2 = jax.random.normal(k4, (V2, D2), dtype=jnp.float32)
    out2 = jax.block_until_ready(order_similarity(lab2, vis2, norm=1.0))
    ref2 = _reference(lab2, vis2, norm=1.0)
    assert out2.shape == (V2, L2)
    assert jnp.allclose(out2, ref2, atol=1e-4, rtol=1e-5)

    # 3) Multi-block grid + multiple D chunks (exercises the k accumulator).
    L3, V3, D3 = 150, 40, 200
    lab3 = jax.random.normal(k5, (L3, D3), dtype=jnp.float32)
    vis3 = jax.random.normal(k6, (V3, D3), dtype=jnp.float32)
    out3 = jax.block_until_ready(order_similarity(lab3, vis3, norm=2.0))
    ref3 = _reference(lab3, vis3, norm=2.0)
    assert out3.shape == (V3, L3)
    assert jnp.allclose(out3, ref3, atol=1e-4, rtol=1e-5)

    # 4) Optional bf16 compute path (v6e/v7x); compare against a bf16-cast ref.
    lab3b = lab3.astype(jnp.bfloat16).astype(jnp.float32)
    vis3b = vis3.astype(jnp.bfloat16).astype(jnp.float32)
    out4 = jax.block_until_ready(
        order_similarity(lab3, vis3, norm=2.0, compute_dtype=jnp.bfloat16))
    ref4 = _reference(lab3b, vis3b, norm=2.0)
    assert jnp.allclose(out4, ref4, atol=5e-2, rtol=5e-2)

    print("KERNEL_OK")
</pallas_src>

<mosaic_0001>
module attributes {stable_mosaic.version = 11 : i64} {
  func.func @_order_kernel(%arg0: i32, %arg1: i32, %arg2: i32, %arg3: memref<1x32x8xf32, #tpu.memory_space<vmem>>, %arg4: memref<32x128xf32, #tpu.memory_space<vmem>>, %arg5: memref<8x128xf32, #tpu.memory_space<vmem>>, %arg6: memref<8x128xf32, #tpu.memory_space<vmem>>) attributes {dimension_semantics = [#tpu.dimension_semantics<parallel>, #tpu.dimension_semantics<parallel>, #tpu.dimension_semantics<arbitrary>], iteration_bounds = array<i64: 2, 1, 1>, scalar_prefetch = 0 : i64, scratch_operands = 1 : i64, tpu.core_type = #tpu.core_type<tc>, window_params = [{transform_indices = @transform_0, window_bounds = array<i64: 1, 32, 8>}, {transform_indices = @transform_1, window_bounds = array<i64: 32, 128>}, {transform_indices = @transform_2, window_bounds = array<i64: 8, 128>}]} {
    %c0_i32 = arith.constant 0 : i32
    %0 = arith.cmpi eq, %arg2, %c0_i32 : i32
    %1 = arith.extui %0 : i1 to i32
    %c0_i32_0 = arith.constant 0 : i32
    %2 = arith.cmpi ne, %1, %c0_i32_0 : i32
    scf.if %2 {
      %cst_47 = arith.constant 0.000000e+00 : f32
      %97 = vector.broadcast %cst_47 : f32 to vector<8x128xf32>
      %c0_48 = arith.constant 0 : index
      %c0_49 = arith.constant 0 : index
      %98 = vector.load %arg6[%c0_48, %c0_49] : memref<8x128xf32, #tpu.memory_space<vmem>>, vector<8x128xf32>
      tpu.vector_store %arg6[%c0_48, %c0_49], %97 {strides = array<i32>} : memref<8x128xf32, #tpu.memory_space<vmem>>, vector<8x128xf32>,
    } else {
    }
    %c0 = arith.constant 0 : index
    %c0_1 = arith.constant 0 : index
    %c0_2 = arith.constant 0 : index
    %3 = vector.load %arg3[%c0, %c0_1, %c0_2] : memref<1x32x8xf32, #tpu.memory_space<vmem>>, vector<1x32x8xf32>
    %4 = vector.shape_cast %3 : vector<1x32x8xf32> to vector<32x8xf32>
    %c0_3 = arith.constant 0 : index
    %c0_4 = arith.constant 0 : index
    %5 = vector.load %arg4[%c0_3, %c0_4] : memref<32x128xf32, #tpu.memory_space<vmem>>, vector<32x128xf32>
    %6 = vector.extract_strided_slice %4 {offsets = [0, 0], sizes = [32, 1], strides = [1, 1]} : vector<32x8xf32> to vector<32x1xf32>
    %7 = vector.broadcast %6 : vector<32x1xf32> to vector<32x128xf32>
    %8 = arith.subf %5, %7 : vector<32x128xf32>
    %cst = arith.constant 0.000000e+00 : f32
    %9 = vector.broadcast %cst : f32 to vector<32x128xf32>
    %10 = arith.maximumf %8, %9 : vector<32x128xf32>
    %11 = arith.mulf %10, %10 : vector<32x128xf32>
    %cst_5 = arith.constant dense<0.000000e+00> : vector<128xf32>
    %12 = vector.multi_reduction <add>, %11, %cst_5 [0] : vector<32x128xf32> to vector<128xf32>
    %13 = vector.shape_cast %12 : vector<128xf32> to vector<1x128xf32>
    %c0_6 = arith.constant 0 : index
    %c0_7 = arith.constant 0 : index
    %14 = vector.load %arg6[%c0_6, %c0_7] : memref<8x128xf32, #tpu.memory_space<vmem>>, vector<1x128xf32>
    %15 = arith.addf %14, %13 : vector<1x128xf32>
    %c0_8 = arith.constant 0 : index
    %c0_9 = arith.constant 0 : index
    %16 = vector.load %arg6[%c0_8, %c0_9] : memref<8x128xf32, #tpu.memory_space<vmem>>, vector<1x128xf32>
    tpu.vector_store %arg6[%c0_8, %c0_9], %15 {strides = array<i32>} : memref<8x128xf32, #tpu.memory_space<vmem>>, vector<1x128xf32>,
    %17 = vector.extract_strided_slice %4 {offsets = [0, 1], sizes = [32, 1], strides = [1, 1]} : vector<32x8xf32> to vector<32x1xf32>
    %18 = vector.broadcast %17 : vector<32x1xf32> to vector<32x128xf32>
    %19 = arith.subf %5, %18 : vector<32x128xf32>
    %cst_10 = arith.constant 0.000000e+00 : f32
    %20 = vector.broadcast %cst_10 : f32 to vector<32x128xf32>
    %21 = arith.maximumf %19, %20 : vector<32x128xf32>
    %22 = arith.mulf %21, %21 : vector<32x128xf32>
    %cst_11 = arith.constant dense<0.000000e+00> : vector<128xf32>
    %23 = vector.multi_reduction <add>, %22, %cst_11 [0] : vector<32x128xf32> to vector<128xf32>
    %24 = vector.shape_cast %23 : vector<128xf32> to vector<1x128xf32>
    %c1 = arith.constant 1 : index
    %c0_12 = arith.constant 0 : index
    %25 = vector.load %arg6[%c1, %c0_12] : memref<8x128xf32, #tpu.memory_space<vmem>>, vector<1x128xf32>
    %26 = arith.addf %25, %24 : vector<1x128xf32>
    %c1_13 = arith.constant 1 : index
    %c0_14 = arith.constant 0 : index
    %27 = vector.load %arg6[%c1_13, %c0_14] : memref<8x128xf32, #tpu.memory_space<vmem>>, vector<1x128xf32>
    tpu.vector_store %arg6[%c1_13, %c0_14], %26 {strides = array<i32>} : memref<8x128xf32, #tpu.memory_space<vmem>>, vector<1x128xf32>,
    %28 = vector.extract_strided_slice %4 {offsets = [0, 2], sizes = [32, 1], strides = [1, 1]} : vector<32x8xf32> to vector<32x1xf32>
    %29 = vector.broadcast %28 : vector<32x1xf32> to vector<32x128xf32>
    %30 = arith.subf %5, %29 : vector<32x128xf32>
    %cst_15 = arith.constant 0.000000e+00 : f32
    %31 = vector.broadcast %cst_15 : f32 to vector<32x128xf32>
    %32 = arith.maximumf %30, %31 : vector<32x128xf32>
    %33 = arith.mulf %32, %32 : vector<32x128xf32>
    %cst_16 = arith.constant dense<0.000000e+00> : vector<128xf32>
    %34 = vector.multi_reduction <add>, %33, %cst_16 [0] : vector<32x128xf32> to vector<128xf32>
    %35 = vector.shape_cast %34 : vector<128xf32> to vector<1x128xf32>
    %c2 = arith.constant 2 : index
    %c0_17 = arith.constant 0 : index
    %36 = vector.load %arg6[%c2, %c0_17] : memref<8x128xf32, #tpu.memory_space<vmem>>, vector<1x128xf32>
    %37 = arith.addf %36, %35 : vector<1x128xf32>
    %c2_18 = arith.constant 2 : index
    %c0_19 = arith.constant 0 : index
    %38 = vector.load %arg6[%c2_18, %c0_19] : memref<8x128xf32, #tpu.memory_space<vmem>>, vector<1x128xf32>
    tpu.vector_store %arg6[%c2_18, %c0_19], %37 {strides = array<i32>} : memref<8x128xf32, #tpu.memory_space<vmem>>, vector<1x128xf32>,
    %39 = vector.extract_strided_slice %4 {offsets = [0, 3], sizes = [32, 1], strides = [1, 1]} : vector<32x8xf32> to vector<32x1xf32>
    %40 = vector.broadcast %39 : vector<32x1xf32> to vector<32x128xf32>
    %41 = arith.subf %5, %40 : vector<32x128xf32>
    %cst_20 = arith.constant 0.000000e+00 : f32
    %42 = vector.broadcast %cst_20 : f32 to vector<32x128xf32>
    %43 = arith.maximumf %41, %42 : vector<32x128xf32>
    %44 = arith.mulf %43, %43 : vector<32x128xf32>
    %cst_21 = arith.constant dense<0.000000e+00> : vector<128xf32>
    %45 = vector.multi_reduction <add>, %44, %cst_21 [0] : vector<32x128xf32> to vector<128xf32>
    %46 = vector.shape_cast %45 : vector<128xf32> to vector<1x128xf32>
    %c3 = arith.constant 3 : index
    %c0_22 = arith.constant 0 : index
    %47 = vector.load %arg6[%c3, %c0_22] : memref<8x128xf32, #tpu.memory_space<vmem>>, vector<1x128xf32>
    %48 = arith.addf %47, %46 : vector<1x128xf32>
    %c3_23 = arith.constant 3 : index
    %c0_24 = arith.constant 0 : index
    %49 = vector.load %arg6[%c3_23, %c0_24] : memref<8x128xf32, #tpu.memory_space<vmem>>, vector<1x128xf32>
    tpu.vector_store %arg6[%c3_23, %c0_24], %48 {strides = array<i32>} : memref<8x128xf32, #tpu.memory_space<vmem>>, vector<1x128xf32>,
    %50 = vector.extract_strided_slice %4 {offsets = [0, 4], sizes = [32, 1], strides = [1, 1]} : vector<32x8xf32> to vector<32x1xf32>
    %51 = vector.broadcast %50 : vector<32x1xf32> to vector<32x128xf32>
    %52 = arith.subf %5, %51 : vector<32x128xf32>
    %cst_25 = arith.constant 0.000000e+00 : f32
    %53 = vector.broadcast %cst_25 : f32 to vector<32x128xf32>
    %54 = arith.maximumf %52, %53 : vector<32x128xf32>
    %55 = arith.mulf %54, %54 : vector<32x128xf32>
    %cst_26 = arith.constant dense<0.000000e+00> : vector<128xf32>
    %56 = vector.multi_reduction <add>, %55, %cst_26 [0] : vector<32x128xf32> to vector<128xf32>
    %57 = vector.shape_cast %56 : vector<128xf32> to vector<1x128xf32>
    %c4 = arith.constant 4 : index
    %c0_27 = arith.constant 0 : index
    %58 = vector.load %arg6[%c4, %c0_27] : memref<8x128xf32, #tpu.memory_space<vmem>>, vector<1x128xf32>
    %59 = arith.addf %58, %57 : vector<1x128xf32>
    %c4_28 = arith.constant 4 : index
    %c0_29 = arith.constant 0 : index
    %60 = vector.load %arg6[%c4_28, %c0_29] : memref<8x128xf32, #tpu.memory_space<vmem>>, vector<1x128xf32>
    tpu.vector_store %arg6[%c4_28, %c0_29], %59 {strides = array<i32>} : memref<8x128xf32, #tpu.memory_space<vmem>>, vector<1x128xf32>,
    %61 = vector.extract_strided_slice %4 {offsets = [0, 5], sizes = [32, 1], strides = [1, 1]} : vector<32x8xf32> to vector<32x1xf32>
    %62 = vector.broadcast %61 : vector<32x1xf32> to vector<32x128xf32>
    %63 = arith.subf %5, %62 : vector<32x128xf32>
    %cst_30 = arith.constant 0.000000e+00 : f32
    %64 = vector.broadcast %cst_30 : f32 to vector<32x128xf32>
    %65 = arith.maximumf %63, %64 : vector<32x128xf32>
    %66 = arith.mulf %65, %65 : vector<32x128xf32>
    %cst_31 = arith.constant dense<0.000000e+00> : vector<128xf32>
    %67 = vector.multi_reduction <add>, %66, %cst_31 [0] : vector<32x128xf32> to vector<128xf32>
    %68 = vector.shape_cast %67 : vector<128xf32> to vector<1x128xf32>
    %c5 = arith.constant 5 : index
    %c0_32 = arith.constant 0 : index
    %69 = vector.load %arg6[%c5, %c0_32] : memref<8x128xf32, #tpu.memory_space<vmem>>, vector<1x128xf32>
    %70 = arith.addf %69, %68 : vector<1x128xf32>
    %c5_33 = arith.constant 5 : index
    %c0_34 = arith.constant 0 : index
    %71 = vector.load %arg6[%c5_33, %c0_34] : memref<8x128xf32, #tpu.memory_space<vmem>>, vector<1x128xf32>
    tpu.vector_store %arg6[%c5_33, %c0_34], %70 {strides = array<i32>} : memref<8x128xf32, #tpu.memory_space<vmem>>, vector<1x128xf32>,
    %72 = vector.extract_strided_slice %4 {offsets = [0, 6], sizes = [32, 1], strides = [1, 1]} : vector<32x8xf32> to vector<32x1xf32>
    %73 = vector.broadcast %72 : vector<32x1xf32> to vector<32x128xf32>
    %74 = arith.subf %5, %73 : vector<32x128xf32>
    %cst_35 = arith.constant 0.000000e+00 : f32
    %75 = vector.broadcast %cst_35 : f32 to vector<32x128xf32>
    %76 = arith.maximumf %74, %75 : vector<32x128xf32>
    %77 = arith.mulf %76, %76 : vector<32x128xf32>
    %cst_36 = arith.constant dense<0.000000e+00> : vector<128xf32>
    %78 = vector.multi_reduction <add>, %77, %cst_36 [0] : vector<32x128xf32> to vector<128xf32>
    %79 = vector.shape_cast %78 : vector<128xf32> to vector<1x128xf32>
    %c6 = arith.constant 6 : index
    %c0_37 = arith.constant 0 : index
    %80 = vector.load %arg6[%c6, %c0_37] : memref<8x128xf32, #tpu.memory_space<vmem>>, vector<1x128xf32>
    %81 = arith.addf %80, %79 : vector<1x128xf32>
    %c6_38 = arith.constant 6 : index
    %c0_39 = arith.constant 0 : index
    %82 = vector.load %arg6[%c6_38, %c0_39] : memref<8x128xf32, #tpu.memory_space<vmem>>, vector<1x128xf32>
    tpu.vector_store %arg6[%c6_38, %c0_39], %81 {strides = array<i32>} : memref<8x128xf32, #tpu.memory_space<vmem>>, vector<1x128xf32>,
    %83 = vector.extract_strided_slice %4 {offsets = [0, 7], sizes = [32, 1], strides = [1, 1]} : vector<32x8xf32> to vector<32x1xf32>
    %84 = vector.broadcast %83 : vector<32x1xf32> to vector<32x128xf32>
    %85 = arith.subf %5, %84 : vector<32x128xf32>
    %cst_40 = arith.constant 0.000000e+00 : f32
    %86 = vector.broadcast %cst_40 : f32 to vector<32x128xf32>
    %87 = arith.maximumf %85, %86 : vector<32x128xf32>
    %88 = arith.mulf %87, %87 : vector<32x128xf32>
    %cst_41 = arith.constant dense<0.000000e+00> : vector<128xf32>
    %89 = vector.multi_reduction <add>, %88, %cst_41 [0] : vector<32x128xf32> to vector<128xf32>
    %90 = vector.shape_cast %89 : vector<128xf32> to vector<1x128xf32>
    %c7 = arith.constant 7 : index
    %c0_42 = arith.constant 0 : index
    %91 = vector.load %arg6[%c7, %c0_42] : memref<8x128xf32, #tpu.memory_space<vmem>>, vector<1x128xf32>
    %92 = arith.addf %91, %90 : vector<1x128xf32>
    %c7_43 = arith.constant 7 : index
    %c0_44 = arith.constant 0 : index
    %93 = vector.load %arg6[%c7_43, %c0_44] : memref<8x128xf32, #tpu.memory_space<vmem>>, vector<1x128xf32>
    tpu.vector_store %arg6[%c7_43, %c0_44], %92 {strides = array<i32>} : memref<8x128xf32, #tpu.memory_space<vmem>>, vector<1x128xf32>,
    %c0_i32_45 = arith.constant 0 : i32
    %94 = arith.cmpi eq, %arg2, %c0_i32_45 : i32
    %95 = arith.extui %94 : i1 to i32
    %c0_i32_46 = arith.constant 0 : i32
    %96 = arith.cmpi ne, %95, %c0_i32_46 : i32
    scf.if %96 {
      %c0_47 = arith.constant 0 : index
      %c0_48 = arith.constant 0 : index
      %97 = vector.load %arg6[%c0_47, %c0_48] : memref<8x128xf32, #tpu.memory_space<vmem>>, vector<8x128xf32>
      %98 = math.sqrt %97 : vector<8x128xf32>
      %cst_49 = arith.constant 0.000000e+00 : f32
      %99 = vector.broadcast %cst_49 : f32 to vector<8x128xf32>
      %100 = arith.subf %99, %98 : vector<8x128xf32>
      %c0_50 = arith.constant 0 : index
      %c0_51 = arith.constant 0 : index
      %101 = vector.load %arg5[%c0_50, %c0_51] : memref<8x128xf32, #tpu.memory_space<vmem>>, vector<8x128xf32>
      tpu.vector_store %arg5[%c0_50, %c0_51], %100 {strides = array<i32>} : memref<8x128xf32, #tpu.memory_space<vmem>>, vector<8x128xf32>,
    } else {
    }
    return
  }
  func.func @transform_0(%arg0: i32, %arg1: i32, %arg2: i32) -> (i32, i32, i32) {
    %c0_i32 = arith.constant 0 : i32
    %c0_i32_0 = arith.constant 0 : i32
    return %arg0, %arg2, %c0_i32 : i32, i32, i32
  }
  func.func @transform_1(%arg0: i32, %arg1: i32, %arg2: i32) -> (i32, i32) {
    %c0_i32 = arith.constant 0 : i32
    return %arg2, %arg1 : i32, i32
  }
  func.func @transform_2(%arg0: i32, %arg1: i32, %arg2: i32) -> (i32, i32) {
    %c0_i32 = arith.constant 0 : i32
    return %arg0, %arg1 : i32, i32
  }
}

</mosaic_0001>

<llo_original>
// kernel: tpu_custom_call.1
$region0: #{tpu_custom_call.1}
  #allocation0 [shape = 'u32[]', space=smem, size = 0x4, offset = 0x4, fixed_abs, tag = 'smem constant byte address 0x4 - core index']
  #allocation1 [shape = 'u32[144,128]{1,0:T(1,128)}', space=vmem, size = 0x12000, scoped, tag = 'internal scratch']
  #allocation2 [shape = 'f32[8,128]{1,0:T(8,128)}', space=vmem, size = 0x1000, scoped, tag = 'scratch operand']
  %s0 = inlined_call_operand.vmem [shape: f32[2,32,8], index: 0, kind: input, shape index: {}]
  %s1 = inlined_call_operand.vmem [shape: f32[32,128], index: 1, kind: input, shape index: {}]
  %s2 = inlined_call_operand.hbm [shape: f32[16,128], index: 2, kind: output, shape index: {}]
  %s3 = sld [smem:[#allocation0]]
  $region49: #{tpu_custom_call.1} parent=0
    _
  %s5 = ssub.s32 1, %s3
  %s6 = scalar_select 0, %s5, %s3
  $region1: #{tpu_custom_call.1} parent=0
    #allocation3 [shape = 'u8[8192]{0}', space=vmem, size = 0x2000, scoped, tag = 'output window, operand 0']
    #allocation4 [shape = 's32[2]{0}', space=sflag, size = 0x8, scoped, tag = 'scoped memory for tpu_custom_call.1']
    %7 = vsyncpa [#allocation4], 0
    %s8 = scalar_lea.sflag [#allocation4], 1
    %9 = vsyncpa %s8, 0
    loop: start=0, step=1, limit=4
    $region2: #{tpu_custom_call.1} parent=1 // loop_pre_header
      _
    $region3: #{tpu_custom_call.1} parent=1 // loop_header
      %s11 = sphi 0, %s15
      %p12 = scmp.ge.s32.totalorder %s11, 4
      %s18 = sphi 0, %s37
      %s19 = sphi 0, %s33
      %s20 = sphi 0, %s29
      %s21 = sphi 0, %s18
      %s22 = sphi 0, %s19
      %s23 = sphi 0, %s20
      %s24 = sphi 0, %s21
      %s25 = sphi 0, %s22
      %s26 = sphi 0, %s23
      %s42 = sphi 0, %s44
      %s45 = sphi 0, %s42
      %s46 = sphi 0, %s45
      %s62 = sphi 0, %s46
      %s70 = sphi 0, %s72
      %s73 = sphi 0, %s70
      %s74 = sphi 0, %s73
      %s90 = sphi 0, %s74
      %s98 = sphi 0, %s100
      %s101 = sphi 0, %s98
      %s102 = sphi 0, %s101
      %s118 = sphi 0, %s102
    $region4: #{tpu_custom_call.1} parent=1 // loop_header_branch
      %14 = sbr.rel (%p12) target = $region8
    $region5: #{tpu_custom_call.1} parent=1 // loop_body
      %s16 = ssub.s32 %s11, 1
      %s17 = ssub.s32 %s11, 2
      %s27 = sadd.s32 1, %s20
      %p28 = scmp.ge.s32.totalorder %s27, 1
      %s29 = scalar_select %p28, 0, %s27
      %s30 = sadd.s32 1, %s19
      %s31 = scalar_select %p28, %s30, %s19
      %p32 = scmp.ge.s32.totalorder %s31, 1
      %s33 = scalar_select %p32, 0, %s31
      %s34 = sadd.s32 1, %s18
      %s35 = scalar_select %p32, %s34, %s18
      %p36 = scmp.ge.s32.totalorder %s35, 2
      %s37 = scalar_select %p36, 0, %s35
      %s38 = ssub.s32 %s18, %s37
      %s39 = ssub.s32 %s20, %s29
      %s40 = sor.u32 %s38, %s39
      %p41 = scmp.eq.s32.totalorder %s40, 0
      %s43 = sadd.s32 %s42, 1
      %s44 = scalar_select %p41, %s42, %s43
      %p47 = pneg %p41
      %p48 = scmp.eq.s32.totalorder %s11, 1
      %p49 = por %p47, %p48
      %p50 = scmp.ne.s32.totalorder %s42, %s45
      %p51 = scmp.eq.s32.totalorder %s11, 0
      %p52 = por %p50, %p51
      %p53 = scmp.ne.s32.totalorder %s42, %s45
      %p54 = scmp.eq.s32.totalorder %s16, 1
      %p55 = por %p53, %p54
      %p56 = scmp.ne.s32.totalorder %s45, %s46
      %p57 = scmp.eq.s32.totalorder %s16, 0
      %p58 = por %p56, %p57
      %p59 = scmp.ne.s32.totalorder %s45, %s46
      %p60 = scmp.eq.s32.totalorder %s17, 1
      %p61 = por %p59, %p60
      %p63 = scmp.ne.s32.totalorder %s46, %s62
      %p64 = scmp.eq.s32.totalorder %s17, 0
      %p65 = por %p63, %p64
      %s66 = ssub.s32 %s20, %s29
      %s67 = ssub.s32 %s19, %s33
      %s68 = sor.u32 %s66, %s67
      %p69 = scmp.eq.s32.totalorder %s68, 0
      %s71 = sadd.s32 %s70, 1
      %s72 = scalar_select %p69, %s70, %s71
      %p75 = pneg %p69
      %p76 = scmp.eq.s32.totalorder %s11, 1
      %p77 = por %p75, %p76
      %p78 = scmp.ne.s32.totalorder %s70, %s73
      %p79 = scmp.eq.s32.totalorder %s11, 0
      %p80 = por %p78, %p79
      %p81 = scmp.ne.s32.totalorder %s70, %s73
      %p82 = scmp.eq.s32.totalorder %s16, 1
      %p83 = por %p81, %p82
      %p84 = scmp.ne.s32.totalorder %s73, %s74
      %p85 = scmp.eq.s32.totalorder %s16, 0
      %p86 = por %p84, %p85
      %p87 = scmp.ne.s32.totalorder %s73, %s74
      %p88 = scmp.eq.s32.totalorder %s17, 1
      %p89 = por %p87, %p88
      %p91 = scmp.ne.s32.totalorder %s74, %s90
      %p92 = scmp.eq.s32.totalorder %s17, 0
      %p93 = por %p91, %p92
      %s94 = ssub.s32 %s18, %s37
      %s95 = ssub.s32 %s19, %s33
      %s96 = sor.u32 %s94, %s95
      %p97 = scmp.eq.s32.totalorder %s96, 0
      %s99 = sadd.s32 %s98, 1
      %s100 = scalar_select %p97, %s98, %s99
      %p103 = pneg %p97
      %p104 = scmp.eq.s32.totalorder %s11, 1
      %p105 = por %p103, %p104
      %p106 = scmp.ne.s32.totalorder %s98, %s101
      %p107 = scmp.eq.s32.totalorder %s11, 0
      %p108 = por %p106, %p107
      %p109 = scmp.ne.s32.totalorder %s98, %s101
      %p110 = scmp.eq.s32.totalorder %s16, 1
      %p111 = por %p109, %p110
      %p112 = scmp.ne.s32.totalorder %s101, %s102
      %p113 = scmp.eq.s32.totalorder %s16, 0
      %p114 = por %p112, %p113
      %p115 = scmp.ne.s32.totalorder %s101, %s102
      %p116 = scmp.eq.s32.totalorder %s17, 1
      %p117 = por %p115, %p116
      %p119 = scmp.ne.s32.totalorder %s102, %s118
      %p120 = scmp.eq.s32.totalorder %s17, 0
      %p121 = por %p119, %p120
      %p122 = scmp.le.s32.totalorder 1, %s11
      %p123 = scmp.lt.s32.totalorder %s11, 3
      %p124 = pnand %p122, %p123
      %p125 = pneg %p124
      // Predicated region
      $region9: #{tpu_custom_call.1} parent=5 // pred_check
        _
      $region10: #{tpu_custom_call.1} parent=5 // pred_check_branch
        %127 = sbr.rel (%p124) target = $region12
      $region11: #{tpu_custom_call.1} parent=5 // pred_region
        %s128 = ssub.s32 %s11, 1
        // Predicated region
        $region13: #{tpu_custom_call.1} parent=11 // pred_check
          %p129 = pneg %p86
        $region14: #{tpu_custom_call.1} parent=11 // pred_check_branch
          %131 = sbr.rel (%p129) target = $region16
        $region15: #{tpu_custom_call.1} parent=11 // pred_region
          %s132 = smul.u32 4, %s23
          %p133 = scmp.lt.s32.totalorder %s132, 3
          %s134 = scalar_select %p133, %s132, 3
          %p135 = scmp.lt.s32.totalorder %s22, 0
          %s136 = scalar_select %p135, %s22, 0
          %s137 = sadd.s32 %s136, %s134
          %s138 = smul.addr %s137, 8
          %s139 = scalar_lea.vmem %s1, %s138
          %s140 = smul.u32 4, %s23
        $region16: #{tpu_custom_call.1} parent=11 // pred_fallthru
          _
      $region12: #{tpu_custom_call.1} parent=5 // pred_fallthru
        _
      %p141 = scmp.lt.s32.totalorder %s11, 2
      // Predicated region
      $region17: #{tpu_custom_call.1} parent=5 // pred_check
        %p142 = pneg %p141
      $region18: #{tpu_custom_call.1} parent=5 // pred_check_branch
        %144 = sbr.rel (%p142) target = $region20
      $region19: #{tpu_custom_call.1} parent=5 // pred_region
        // Predicated region
        $region21: #{tpu_custom_call.1} parent=19 // pred_check
          %p145 = pneg %p52
        $region22: #{tpu_custom_call.1} parent=19 // pred_check_branch
          %147 = sbr.rel (%p145) target = $region24
        $region23: #{tpu_custom_call.1} parent=19 // pred_region
          %s148 = smul.u32 4, %s20
          %p149 = scmp.lt.s32.totalorder %s18, 1
          %s150 = scalar_select %p149, %s18, 1
          %p151 = scmp.lt.s32.totalorder %s148, 3
          %s152 = scalar_select %p151, %s148, 3
          %s153 = smul.addr %s150, 4
          %s154 = sadd.s32 %s152, %s153
          %s155 = smul.addr %s154, 8
          %s156 = scalar_lea.vmem %s0, %s155
          %s157 = smul.u32 4, %s20
        $region24: #{tpu_custom_call.1} parent=19 // pred_fallthru
          _
      $region20: #{tpu_custom_call.1} parent=5 // pred_fallthru
        _
      %p158 = scmp.le.s32.totalorder 1, %s11
      %p159 = scmp.lt.s32.totalorder %s11, 3
      %p160 = pnand %p158, %p159
      %p161 = pneg %p160
      // Predicated region
      $region25: #{tpu_custom_call.1} parent=5 // pred_check
        _
      $region26: #{tpu_custom_call.1} parent=5 // pred_check_branch
        %163 = sbr.rel (%p160) target = $region28
      $region27: #{tpu_custom_call.1} parent=5 // pred_region
        %s164 = ssub.s32 %s11, 1
        %s165 = smul.u32 4, %s23
        %p166 = scmp.lt.s32.totalorder %s21, 1
        %s167 = scalar_select %p166, %s21, 1
        %p168 = scmp.lt.s32.totalorder %s165, 3
        %s169 = scalar_select %p168, %s165, 3
        %s170 = smul.addr %s167, 4
        %s171 = sadd.s32 %s169, %s170
        %s172 = smul.addr %s171, 8
        %s173 = scalar_lea.vmem %s0, %s172
        %p174 = pneg %p58
        %p175 = pneg %p55
        %s176 = smul.u32 4, %s23
        %p177 = scmp.lt.s32.totalorder %s176, 3
        %s178 = scalar_select %p177, %s176, 3
        %p179 = scmp.lt.s32.totalorder %s22, 0
        %s180 = scalar_select %p179, %s22, 0
        %s181 = sadd.s32 %s180, %s178
        %s182 = smul.addr %s181, 8
        %s183 = scalar_lea.vmem %s1, %s182
        %p184 = pneg %p86
        %p185 = pneg %p83
        %p186 = pneg %p114
        %p187 = pneg %p111
        %s188 = sand.u32 %s101, 1
        %s189 = scalar_lea.sflag [#allocation4], %s188
        %s190 = sand.u32 %s101, 1
        %s191 = smul.addr %s190, 8
        %s192 = scalar_lea.vmem [#allocation3], %s191
        %s193 = smul.u32 4, %s23
        %p194 = scmp.lt.s32.totalorder %s21, 1
        %s195 = scalar_select %p194, %s21, 1
        %p196 = scmp.lt.s32.totalorder %s193, 3
        %s197 = scalar_select %p196, %s193, 3
        %s198 = smul.addr %s195, 4
        %s199 = sadd.s32 %s197, %s198
        %s200 = smul.addr %s199, 8
        %s201 = scalar_lea.vmem %s0, %s200
        %s202 = smul.u32 4, %s23
        %s203 = smul.u32 4, %s23
        %p204 = scmp.lt.s32.totalorder %s203, 3
        %s205 = scalar_select %p204, %s203, 3
        %p206 = scmp.lt.s32.totalorder %s22, 0
        %s207 = scalar_select %p206, %s22, 0
        %s208 = sadd.s32 %s207, %s205
        %s209 = smul.addr %s208, 8
        %s210 = scalar_lea.vmem %s1, %s209
        %s211 = smul.u32 4, %s23
        %p212 = scmp.eq.s32.totalorder %s23, 0
        // Predicated region
        $region29: #{tpu_custom_call.1} parent=27 // pred_check
          %p213 = pneg %p212
        $region30: #{tpu_custom_call.1} parent=27 // pred_check_branch
          %215 = sbr.rel (%p213) target = $region32
        $region31: #{tpu_custom_call.1} parent=27 // pred_region
          %216 = vst [vmem:[#allocation2] sm:$0xff] 0.0
        $region32: #{tpu_custom_call.1} parent=27 // pred_fallthru
          _
        %v217 = vld [vmem:[%s201] sm:$0xff]
        %v218 = vld [vmem:[%s201 + $0x8] sm:$0xff]
        %v219 = vld [vmem:[%s201 + $0x10] sm:$0xff]
        %v220 = vld [vmem:[%s201 + $0x18] sm:$0xff]
        %v221 = vld [vmem:[%s210] sm:$0xff]
        %v222 = vld [vmem:[%s210 + $0x8] sm:$0xff]
        %v223 = vld [vmem:[%s210 + $0x10] sm:$0xff]
        %v224 = vld [vmem:[%s210 + $0x18] sm:$0xff]
        %226 = vset.pattern.permute.xlu0 0
        %227 = vperm.xlu0 %226, %v217
        %v228 = vpop.permute.xlu0 %227
        %231 = vset.pattern.permute.xlu0 0
        %232 = vperm.xlu0 %231, %v218
        %v233 = vpop.permute.xlu0 %232
        %236 = vset.pattern.permute.xlu0 0
        %237 = vperm.xlu0 %236, %v219
        %v238 = vpop.permute.xlu0 %237
        %241 = vset.pattern.permute.xlu0 0
        %242 = vperm.xlu0 %241, %v220
        %v243 = vpop.permute.xlu0 %242
        %v245 = vsub.f32 %v221, %v228
        %v246 = vsub.f32 %v222, %v233
        %v247 = vsub.f32 %v223, %v238
        %v248 = vsub.f32 %v224, %v243
        %v249 = vmax.f32 %v245, 0.0
        %v250 = vmax.f32 %v246, 0.0
        %v251 = vmax.f32 %v247, 0.0
        %v252 = vmax.f32 %v248, 0.0
        %v253 = vmul.f32 %v249, %v249
        %v254 = vmul.f32 %v250, %v250
        %v255 = vmul.f32 %v251, %v251
        %v256 = vmul.f32 %v252, %v252
        %v257 = vadd.f32 %v253, %v254
        %v258 = vadd.f32 %v257, %v255
        %v259 = vadd.f32 %v258, %v256
        %v260 = vrot.slane %v259, 4
        %v261 = vadd.f32 %v259, %v260
        %v262 = vrot.slane %v261, 2
        %v263 = vadd.f32 %v261, %v262
        %v264 = vrot.slane %v263, 1
        %v265 = vadd.f32 %v263, %v264
        %v266 = vld [vmem:[#allocation2] sm:$0x1]
        %v267 = vadd.f32 %v266, %v265
        %268 = vst [vmem:[#allocation2] sm:$0x1] %v267
        %269 = vset.pattern.permute.xlu0 1
        %270 = vperm.xlu0 %269, %v217
        %v271 = vpop.permute.xlu0 %270
        %273 = vset.pattern.permute.xlu0 1
        %274 = vperm.xlu0 %273, %v218
        %v275 = vpop.permute.xlu0 %274
        %277 = vset.pattern.permute.xlu0 1
        %278 = vperm.xlu0 %277, %v219
        %v279 = vpop.permute.xlu0 %278
        %281 = vset.pattern.permute.xlu0 1
        %282 = vperm.xlu0 %281, %v220
        %v283 = vpop.permute.xlu0 %282
        %v285 = vsub.f32 %v221, %v271
        %v286 = vsub.f32 %v222, %v275
        %v287 = vsub.f32 %v223, %v279
        %v288 = vsub.f32 %v224, %v283
        %v289 = vmax.f32 %v285, 0.0
        %v290 = vmax.f32 %v286, 0.0
        %v291 = vmax.f32 %v287, 0.0
        %v292 = vmax.f32 %v288, 0.0
        %v293 = vmul.f32 %v289, %v289
        %v294 = vmul.f32 %v290, %v290
        %v295 = vmul.f32 %v291, %v291
        %v296 = vmul.f32 %v292, %v292
        %v297 = vadd.f32 %v293, %v294
        %v298 = vadd.f32 %v297, %v295
        %v299 = vadd.f32 %v298, %v296
        %v300 = vrot.slane %v299, 4
        %v301 = vadd.f32 %v299, %v300
        %v302 = vrot.slane %v301, 2
        %v303 = vadd.f32 %v301, %v302
        %v304 = vrot.slane %v303, 1
        %v305 = vadd.f32 %v303, %v304
        %v306 = vld [vmem:[#allocation2 + $0x1] sm:$0x1]
        %v307 = vadd.f32 %v306, %v305
        %308 = vst [vmem:[#allocation2 + $0x1] sm:$0x1] %v307
        %309 = vset.pattern.permute.xlu0 2
        %310 = vperm.xlu0 %309, %v217
        %v311 = vpop.permute.xlu0 %310
        %313 = vset.pattern.permute.xlu0 2
        %314 = vperm.xlu0 %313, %v218
        %v315 = vpop.permute.xlu0 %314
        %317 = vset.pattern.permute.xlu0 2
        %318 = vperm.xlu0 %317, %v219
        %v319 = vpop.permute.xlu0 %318
        %321 = vset.pattern.permute.xlu0 2
        %322 = vperm.xlu0 %321, %v220
        %v323 = vpop.permute.xlu0 %322
        %v325 = vsub.f32 %v221, %v311
        %v326 = vsub.f32 %v222, %v315
        %v327 = vsub.f32 %v223, %v319
        %v328 = vsub.f32 %v224, %v323
        %v329 = vmax.f32 %v325, 0.0
        %v330 = vmax.f32 %v326, 0.0
        %v331 = vmax.f32 %v327, 0.0
        %v332 = vmax.f32 %v328, 0.0
        %v333 = vmul.f32 %v329, %v329
        %v334 = vmul.f32 %v330, %v330
        %v335 = vmul.f32 %v331, %v331
        %v336 = vmul.f32 %v332, %v332
        %v337 = vadd.f32 %v333, %v334
        %v338 = vadd.f32 %v337, %v335
        %v339 = vadd.f32 %v338, %v336
        %v340 = vrot.slane %v339, 4
        %v341 = vadd.f32 %v339, %v340
        %v342 = vrot.slane %v341, 2
        %v343 = vadd.f32 %v341, %v342
        %v344 = vrot.slane %v343, 1
        %v345 = vadd.f32 %v343, %v344
        %v346 = vld [vmem:[#allocation2 + $0x2] sm:$0x1]
        %v347 = vadd.f32 %v346, %v345
        %348 = vst [vmem:[#allocation2 + $0x2] sm:$0x1] %v347
        %349 = vset.pattern.permute.xlu0 3
        %350 = vperm.xlu0 %349, %v217
        %v351 = vpop.permute.xlu0 %350
        %353 = vset.pattern.permute.xlu0 3
        %354 = vperm.xlu0 %353, %v218
        %v355 = vpop.permute.xlu0 %354
        %357 = vset.pattern.permute.xlu0 3
        %358 = vperm.xlu0 %357, %v219
        %v359 = vpop.permute.xlu0 %358
        %361 = vset.pattern.permute.xlu0 3
        %362 = vperm.xlu0 %361, %v220
        %v363 = vpop.permute.xlu0 %362
        %v365 = vsub.f32 %v221, %v351
        %v366 = vsub.f32 %v222, %v355
        %v367 = vsub.f32 %v223, %v359
        %v368 = vsub.f32 %v224, %v363
        %v369 = vmax.f32 %v365, 0.0
        %v370 = vmax.f32 %v366, 0.0
        %v371 = vmax.f32 %v367, 0.0
        %v372 = vmax.f32 %v368, 0.0
        %v373 = vmul.f32 %v369, %v369
        %v374 = vmul.f32 %v370, %v370
        %v375 = vmul.f32 %v371, %v371
        %v376 = vmul.f32 %v372, %v372
        %v377 = vadd.f32 %v373, %v374
        %v378 = vadd.f32 %v377, %v375
        %v379 = vadd.f32 %v378, %v376
        %v380 = vrot.slane %v379, 4
        %v381 = vadd.f32 %v379, %v380
        %v382 = vrot.slane %v381, 2
        %v383 = vadd.f32 %v381, %v382
        %v384 = vrot.slane %v383, 1
        %v385 = vadd.f32 %v383, %v384
        %v386 = vld [vmem:[#allocation2 + $0x3] sm:$0x1]
        %v387 = vadd.f32 %v386, %v385
        %388 = vst [vmem:[#allocation2 + $0x3] sm:$0x1] %v387
        %389 = vset.pattern.permute.xlu0 4
        %390 = vperm.xlu0 %389, %v217
        %v391 = vpop.permute.xlu0 %390
        %393 = vset.pattern.permute.xlu0 4
        %394 = vperm.xlu0 %393, %v218
        %v395 = vpop.permute.xlu0 %394
        %397 = vset.pattern.permute.xlu0 4
        %398 = vperm.xlu0 %397, %v219
        %v399 = vpop.permute.xlu0 %398
        %401 = vset.pattern.permute.xlu0 4
        %402 = vperm.xlu0 %401, %v220
        %v403 = vpop.permute.xlu0 %402
        %v405 = vsub.f32 %v221, %v391
        %v406 = vsub.f32 %v222, %v395
        %v407 = vsub.f32 %v223, %v399
        %v408 = vsub.f32 %v224, %v403
        %v409 = vmax.f32 %v405, 0.0
        %v410 = vmax.f32 %v406, 0.0
        %v411 = vmax.f32 %v407, 0.0
        %v412 = vmax.f32 %v408, 0.0
        %v413 = vmul.f32 %v409, %v409
        %v414 = vmul.f32 %v410, %v410
        %v415 = vmul.f32 %v411, %v411
        %v416 = vmul.f32 %v412, %v412
        %v417 = vadd.f32 %v413, %v414
        %v418 = vadd.f32 %v417, %v415
        %v419 = vadd.f32 %v418, %v416
        %v420 = vrot.slane %v419, 4
        %v421 = vadd.f32 %v419, %v420
        %v422 = vrot.slane %v421, 2
        %v423 = vadd.f32 %v421, %v422
        %v424 = vrot.slane %v423, 1
        %v425 = vadd.f32 %v423, %v424
        %v426 = vld [vmem:[#allocation2 + $0x4] sm:$0x1]
        %v427 = vadd.f32 %v426, %v425
        %428 = vst [vmem:[#allocation2 + $0x4] sm:$0x1] %v427
        %429 = vset.pattern.permute.xlu0 5
        %430 = vperm.xlu0 %429, %v217
        %v431 = vpop.permute.xlu0 %430
        %433 = vset.pattern.permute.xlu0 5
        %434 = vperm.xlu0 %433, %v218
        %v435 = vpop.permute.xlu0 %434
        %437 = vset.pattern.permute.xlu0 5
        %438 = vperm.xlu0 %437, %v219
        %v439 = vpop.permute.xlu0 %438
        %441 = vset.pattern.permute.xlu0 5
        %442 = vperm.xlu0 %441, %v220
        %v443 = vpop.permute.xlu0 %442
        %v445 = vsub.f32 %v221, %v431
        %v446 = vsub.f32 %v222, %v435
        %v447 = vsub.f32 %v223, %v439
        %v448 = vsub.f32 %v224, %v443
        %v449 = vmax.f32 %v445, 0.0
        %v450 = vmax.f32 %v446, 0.0
        %v451 = vmax.f32 %v447, 0.0
        %v452 = vmax.f32 %v448, 0.0
        %v453 = vmul.f32 %v449, %v449
        %v454 = vmul.f32 %v450, %v450
        %v455 = vmul.f32 %v451, %v451
        %v456 = vmul.f32 %v452, %v452
        %v457 = vadd.f32 %v453, %v454
        %v458 = vadd.f32 %v457, %v455
        %v459 = vadd.f32 %v458, %v456
        %v460 = vrot.slane %v459, 4
        %v461 = vadd.f32 %v459, %v460
        %v462 = vrot.slane %v461, 2
        %v463 = vadd.f32 %v461, %v462
        %v464 = vrot.slane %v463, 1
        %v465 = vadd.f32 %v463, %v464
        %v466 = vld [vmem:[#allocation2 + $0x5] sm:$0x1]
        %v467 = vadd.f32 %v466, %v465
        %468 = vst [vmem:[#allocation2 + $0x5] sm:$0x1] %v467
        %469 = vset.pattern.permute.xlu0 6
        %470 = vperm.xlu0 %469, %v217
        %v471 = vpop.permute.xlu0 %470
        %473 = vset.pattern.permute.xlu0 6
        %474 = vperm.xlu0 %473, %v218
        %v475 = vpop.permute.xlu0 %474
        %477 = vset.pattern.permute.xlu0 6
        %478 = vperm.xlu0 %477, %v219
        %v479 = vpop.permute.xlu0 %478
        %481 = vset.pattern.permute.xlu0 6
        %482 = vperm.xlu0 %481, %v220
        %v483 = vpop.permute.xlu0 %482
        %v485 = vsub.f32 %v221, %v471
        %v486 = vsub.f32 %v222, %v475
        %v487 = vsub.f32 %v223, %v479
        %v488 = vsub.f32 %v224, %v483
        %v489 = vmax.f32 %v485, 0.0
        %v490 = vmax.f32 %v486, 0.0
        %v491 = vmax.f32 %v487, 0.0
        %v492 = vmax.f32 %v488, 0.0
        %v493 = vmul.f32 %v489, %v489
        %v494 = vmul.f32 %v490, %v490
        %v495 = vmul.f32 %v491, %v491
        %v496 = vmul.f32 %v492, %v492
        %v497 = vadd.f32 %v493, %v494
        %v498 = vadd.f32 %v497, %v495
        %v499 = vadd.f32 %v498, %v496
        %v500 = vrot.slane %v499, 4
        %v501 = vadd.f32 %v499, %v500
        %v502 = vrot.slane %v501, 2
        %v503 = vadd.f32 %v501, %v502
        %v504 = vrot.slane %v503, 1
        %v505 = vadd.f32 %v503, %v504
        %v506 = vld [vmem:[#allocation2 + $0x6] sm:$0x1]
        %v507 = vadd.f32 %v506, %v505
        %508 = vst [vmem:[#allocation2 + $0x6] sm:$0x1] %v507
        %509 = vset.pattern.permute.xlu0 7
        %510 = vperm.xlu0 %509, %v217
        %v511 = vpop.permute.xlu0 %510
        %513 = vset.pattern.permute.xlu0 7
        %514 = vperm.xlu0 %513, %v218
        %v515 = vpop.permute.xlu0 %514
        %517 = vset.pattern.permute.xlu0 7
        %518 = vperm.xlu0 %517, %v219
        %v519 = vpop.permute.xlu0 %518
        %521 = vset.pattern.permute.xlu0 7
        %522 = vperm.xlu0 %521, %v220
        %v523 = vpop.permute.xlu0 %522
        %v525 = vsub.f32 %v221, %v511
        %v526 = vsub.f32 %v222, %v515
        %v527 = vsub.f32 %v223, %v519
        %v528 = vsub.f32 %v224, %v523
        %v529 = vmax.f32 %v525, 0.0
        %v530 = vmax.f32 %v526, 0.0
        %v531 = vmax.f32 %v527, 0.0
        %v532 = vmax.f32 %v528, 0.0
        %v533 = vmul.f32 %v529, %v529
        %v534 = vmul.f32 %v530, %v530
        %v535 = vmul.f32 %v531, %v531
        %v536 = vmul.f32 %v532, %v532
        %v537 = vadd.f32 %v533, %v534
        %v538 = vadd.f32 %v537, %v535
        %v539 = vadd.f32 %v538, %v536
        %v540 = vrot.slane %v539, 4
        %v541 = vadd.f32 %v539, %v540
        %v542 = vrot.slane %v541, 2
        %v543 = vadd.f32 %v541, %v542
        %v544 = vrot.slane %v543, 1
        %v545 = vadd.f32 %v543, %v544
        %v546 = vld [vmem:[#allocation2 + $0x7] sm:$0x1]
        %v547 = vadd.f32 %v546, %v545
        %548 = vst [vmem:[#allocation2 + $0x7] sm:$0x1] %v547
        // Predicated region
        $region33: #{tpu_custom_call.1} parent=27 // pred_check
          %p549 = pneg %p212
        $region34: #{tpu_custom_call.1} parent=27 // pred_check_branch
          %551 = sbr.rel (%p549) target = $region36
        $region35: #{tpu_custom_call.1} parent=27 // pred_region
          %v552 = vld [vmem:[#allocation2] sm:$0xff]
          %v553 = vrsqrt.pop %v552
          %v554 = vmul.f32 %v552, %v553
          %vm555 = vcmp.eq.f32.partialorder %v552, inf
          %v556 = vsel %vm555, %v552, %v554
          %vm557 = vcmp.eq.f32.partialorder %v552, 0.0
          %v558 = vand.u32 %v552, 2147483648
          %v559 = vsel %vm557, %v558, %v556
          %v560 = vsub.f32 0.0, %v559
          %561 = vst [vmem:[%s192] sm:$0xff] %v560
        $region36: #{tpu_custom_call.1} parent=27 // pred_fallthru
          _
        %s562 = sand.u32 %s101, 1
        %s563 = scalar_lea.sflag [#allocation4], %s562
        %s564 = sand.u32 %s101, 1
        %s565 = smul.addr %s564, 8
        %s566 = scalar_lea.vmem [#allocation3], %s565
        // Predicated region
        $region37: #{tpu_custom_call.1} parent=27 // pred_check
          %p567 = pneg %p111
        $region38: #{tpu_custom_call.1} parent=27 // pred_check_branch
          %569 = sbr.rel (%p567) target = $region40
        $region39: #{tpu_custom_call.1} parent=27 // pred_region
          %s571 = ssub.s32 128, 128
          %572 = vsyncadd %s563, %s571
          %s573 = sadd.s32 %s22, %s21
          %s574 = smul.addr %s573, 128
          %s575 = scalar_lea.hbm %s2, %s574
          %s577 = sshll.u32 %s566, 4
          %s578 = int_to_ptr.vmem [resolvable:$true] %s577
          %580 = dma.vmem_to_hbm [thread:$0]  %s578, 128, %s575, %s563
        $region40: #{tpu_custom_call.1} parent=27 // pred_fallthru
          _
      $region28: #{tpu_custom_call.1} parent=5 // pred_fallthru
        _
      %p581 = scmp.le.s32.totalorder 2, %s11
      // Predicated region
      $region41: #{tpu_custom_call.1} parent=5 // pred_check
        %p582 = pneg %p581
      $region42: #{tpu_custom_call.1} parent=5 // pred_check_branch
        %584 = sbr.rel (%p582) target = $region44
      $region43: #{tpu_custom_call.1} parent=5 // pred_region
        %s585 = ssub.s32 %s11, 2
        // Predicated region
        $region45: #{tpu_custom_call.1} parent=43 // pred_check
          %p586 = pneg %p117
        $region46: #{tpu_custom_call.1} parent=43 // pred_check_branch
          %588 = sbr.rel (%p586) target = $region48
        $region47: #{tpu_custom_call.1} parent=43 // pred_region
          %s589 = sand.u32 %s102, 1
          %s590 = scalar_lea.sflag [#allocation4], %s589
          %s591 = sand.u32 %s102, 1
          %s592 = smul.addr %s591, 8
          %s593 = scalar_lea.vmem [#allocation3], %s592
          %594 = dma.done %s590, 128
        $region48: #{tpu_custom_call.1} parent=43 // pred_fallthru
          _
      $region44: #{tpu_custom_call.1} parent=5 // pred_fallthru
        _
    $region6: #{tpu_custom_call.1} parent=1 // loop_footer
      %s15 = sadd.s32 1, %s11
    $region7: #{tpu_custom_call.1} parent=1 // loop_footer_branch
      %10 = sbr.rel target = $region3
    $region8: #{tpu_custom_call.1} parent=1 // loop_exit
      _
    %595 = vsyncpa [#allocation4], 1
    %s596 = scalar_lea.sflag [#allocation4], 1
    %597 = vsyncpa %s596, 1

</llo_original>
